<compile_context>
chip_gen: v5e
topology: v5e:2x2
jax: 0.10.0
libtpu: 0.0.40
codegen_flags: <defaults>
</compile_context>

<pallas_src>
import functools

import jax
import jax.numpy as jnp
from jax import lax
from jax.experimental import pallas as pl
from jax.experimental.pallas import tpu as pltpu

# Per-step input-tile byte target (measured streaming sweet spot is ~1-12 MiB).
_SWEET_SPOT_TILE_BYTES = 8 * 1024 * 1024
# Scoped VMEM limit: safe on every generation (v7x per-TC VMEM is 64 MiB).
_VMEM_LIMIT_BYTES = 48 * 1024 * 1024
# Budget for 2x(in+out) double buffers + f32 working set, with headroom below
# the scoped limit.
_FOOTPRINT_BUDGET_BYTES = 32 * 1024 * 1024


def _rmsnorm_kernel(x_ref, w_ref, o_ref, *, eps: float, d_model: int):
    # x_ref: (tm, d_pad), w_ref: (1, d_pad) f32, o_ref: (tm, d_pad)
    x = x_ref[...].astype(jnp.float32)
    w = w_ref[...]                                      # already float32 (wrapper)
    ss = jnp.sum(x * x, axis=-1, keepdims=True)         # (tm, 1)
    # Fused rsqrt on the EUP; divide-by-d folded into a constant multiply.
    # NOTE: d_model is the *unpadded* feature count.
    inv = lax.rsqrt(ss * (1.0 / float(d_model)) + eps)  # (tm, 1)
    o_ref[...] = (x * (inv * w)).astype(o_ref.dtype)
    # TODO(synk): if a v7x bundle dump ever shows the VALU slot saturating for
    # bf16 inputs, offload the sum-of-squares to the MXU via a (tm,d)x(d,1)
    # ones matmul instead of x*x + cross-lane reduce.


def _pick_tile_rows(rows: int, d_padded: int, dtype) -> int:
    """Byte-targeted, sublane-aligned row tile; prefers a divisor of `rows`."""
    itemsize = jnp.dtype(dtype).itemsize
    sub = max(8, 32 // itemsize)          # sublane multiple: 8 f32 / 16 bf16 / 32 int8
    # Per-row VMEM footprint: double-buffered in + out tiles (4 * itemsize)
    # plus ~8 B/elem of f32 working set in the body.
    bytes_per_row = d_padded * (4 * itemsize + 8)
    tm = int(min(_FOOTPRINT_BUDGET_BYTES // max(bytes_per_row, 1),
                 _SWEET_SPOT_TILE_BYTES // max(d_padded * itemsize, 1)))
    tm = max(sub, tm - tm % sub)
    if tm >= rows:
        # Everything fits in one block: take it (no forced split on 1-TC parts;
        # such inputs are a few microseconds of work anyway).
        return rows
    # When splitting anyway, keep >= 4 grid steps so v7x's two TensorCores each
    # get >= 2 pipelined steps (cheap no-op overhead on 1-TC v5e/v6e).
    if rows // tm < 4 and rows >= 4 * sub:
        quarter = rows // 4
        tm = min(tm, max(sub, quarter - quarter % sub))
    # Prefer a sublane-aligned divisor of rows (no ragged tail) near the budget.
    t = tm
    while t >= max(sub, tm // 2):
        if rows % t == 0:
            return t
        t -= sub
    # No nearby divisor: use the budgeted tile and let Pallas mask the partial
    # last block (rows are independent, so the padded-row garbage is harmless).
    return tm


def rmsnorm(x: jax.Array, weight: jax.Array, eps: float = 1e-5, *,
            tile_rows: int | None = None) -> jax.Array:
    """RMSNorm over the last axis of x, scaled by `weight` (shape (d_model,))."""
    orig_shape = x.shape
    d_model = orig_shape[-1]
    assert weight.shape == (d_model,)

    rows = 1
    for s in orig_shape[:-1]:
        rows *= s
    x2d = x.reshape(rows, d_model)
    w2d = weight.reshape(1, d_model).astype(jnp.float32)   # hoist the cast

    # Lane-dense output stores: pad the feature axis to a multiple of 128 if
    # needed.  Zero feature padding does not change the per-row sum of squares,
    # and the padded weight columns are zero, so the extra output columns are
    # sliced off below.  (Typical transformer d_model never hits this path.)
    if d_model % 128 != 0:
        d_padded = ((d_model + 127) // 128) * 128
        x2d = jnp.pad(x2d, ((0, 0), (0, d_padded - d_model)))
        w2d = jnp.pad(w2d, ((0, 0), (0, d_padded - d_model)))
    else:
        d_padded = d_model

    if tile_rows is not None:
        itemsize = jnp.dtype(x.dtype).itemsize
        sub = max(8, 32 // itemsize)
        tm = min(int(tile_rows), rows)
        if tm < rows:
            tm = max(sub, tm - tm % sub)
    else:
        tm = _pick_tile_rows(rows, d_padded, x.dtype)

    grid_rows = pl.cdiv(rows, tm)
    kernel = functools.partial(_rmsnorm_kernel, eps=float(eps), d_model=d_model)

    out2d = pl.pallas_call(
        kernel,
        out_shape=jax.ShapeDtypeStruct((rows, d_padded), x.dtype),
        grid_spec=pltpu.PrefetchScalarGridSpec(
            num_scalar_prefetch=0,
            grid=(grid_rows,),
            in_specs=[
                pl.BlockSpec((tm, d_padded), lambda i: (i, 0)),
                pl.BlockSpec((1, d_padded), lambda i: (0, 0)),
            ],
            out_specs=pl.BlockSpec((tm, d_padded), lambda i: (i, 0)),
        ),
        compiler_params=pltpu.CompilerParams(
            dimension_semantics=("parallel",),
            vmem_limit_bytes=_VMEM_LIMIT_BYTES,
        ),
    )(x2d, w2d)

    if d_padded != d_model:
        out2d = out2d[:, :d_model]
    return out2d.reshape(orig_shape)


def rmsnorm_ref(x, weight, eps=1e-5):
    x32 = x.astype(jnp.float32)
    ss = jnp.sum(x32 * x32, axis=-1, keepdims=True)
    rms = jnp.sqrt(ss / x.shape[-1] + eps)
    return ((weight.astype(jnp.float32) / rms) * x32).astype(x.dtype)


if __name__ == "__main__":
    key = jax.random.PRNGKey(0)
    k0, k1, k2, k3 = jax.random.split(key, 4)

    # Main demo: small shapes, d_model is a lane-dense multiple of 128.
    batch, seq, d_model = 2, 8, 128
    x = jax.random.normal(k0, (batch, seq, d_model), dtype=jnp.float32)
    weight = jnp.ones((d_model,), dtype=jnp.float32)   # torch.nn.init.ones_
    out = jax.block_until_ready(rmsnorm(x, weight, eps=1e-5))
    ref = rmsnorm_ref(x, weight, eps=1e-5)
    assert out.shape == x.shape and out.dtype == x.dtype
    assert jnp.allclose(out, ref, atol=1e-5, rtol=1e-5)

    # Ragged row-tail path: rows=40 with a forced 16-row tile (grid=3, masked tail).
    x_r = jax.random.normal(k1, (5, 8, d_model), dtype=jnp.float32)
    out_r = jax.block_until_ready(rmsnorm(x_r, weight, eps=1e-5, tile_rows=16))
    assert jnp.allclose(out_r, rmsnorm_ref(x_r, weight), atol=1e-5, rtol=1e-5)

    # bf16 path.
    x_b = jax.random.normal(k2, (4, 8, d_model), dtype=jnp.bfloat16)
    w_b = jnp.ones((d_model,), dtype=jnp.bfloat16)
    out_b = jax.block_until_ready(rmsnorm(x_b, w_b, eps=1e-5))
    assert out_b.dtype == jnp.bfloat16
    assert jnp.allclose(out_b.astype(jnp.float32),
                        rmsnorm_ref(x_b, w_b).astype(jnp.float32),
                        atol=2e-2, rtol=2e-2)

    # Non-128-multiple d_model path (feature padding for lane-dense stores).
    x_o = jax.random.normal(k3, (2, 8, 96), dtype=jnp.float32)
    w_o = jnp.ones((96,), dtype=jnp.float32)
    out_o = jax.block_until_ready(rmsnorm(x_o, w_o, eps=1e-5))
    assert jnp.allclose(out_o, rmsnorm_ref(x_o, w_o), atol=1e-5, rtol=1e-5)

    print("KERNEL_OK")
</pallas_src>

<mosaic_0001>
module attributes {stable_mosaic.version = 11 : i64} {
  func.func @_rmsnorm_kernel(%arg0: i32, %arg1: memref<16x128xf32, #tpu.memory_space<vmem>>, %arg2: memref<1x128xf32, #tpu.memory_space<vmem>>, %arg3: memref<16x128xf32, #tpu.memory_space<vmem>>) attributes {dimension_semantics = [#tpu.dimension_semantics<parallel>], iteration_bounds = array<i64: 1>, scalar_prefetch = 0 : i64, scratch_operands = 0 : i64, tpu.core_type = #tpu.core_type<tc>, window_params = [{transform_indices = @transform_0, window_bounds = array<i64: 16, 128>}, {pipeline_mode = #tpu.pipeline_mode<synchronous>, transform_indices = @transform_1, window_bounds = array<i64: 1, 128>}, {transform_indices = @transform_2, window_bounds = array<i64: 16, 128>}]} {
    %c0 = arith.constant 0 : index
    %c0_0 = arith.constant 0 : index
    %0 = vector.load %arg1[%c0, %c0_0] : memref<16x128xf32, #tpu.memory_space<vmem>>, vector<16x128xf32>
    %c0_1 = arith.constant 0 : index
    %c0_2 = arith.constant 0 : index
    %1 = vector.load %arg2[%c0_1, %c0_2] : memref<1x128xf32, #tpu.memory_space<vmem>>, vector<1x128xf32>
    %2 = arith.mulf %0, %0 : vector<16x128xf32>
    %cst = arith.constant dense<0.000000e+00> : vector<16xf32>
    %3 = vector.multi_reduction <add>, %2, %cst [1] : vector<16x128xf32> to vector<16xf32>
    %4 = vector.shape_cast %3 : vector<16xf32> to vector<16x1xf32>
    %cst_3 = arith.constant 7.812500e-03 : f32
    %5 = vector.broadcast %cst_3 : f32 to vector<16x1xf32>
    %6 = arith.mulf %4, %5 : vector<16x1xf32>
    %cst_4 = arith.constant 9.99999974E-6 : f32
    %7 = vector.broadcast %cst_4 : f32 to vector<16x1xf32>
    %8 = arith.addf %6, %7 : vector<16x1xf32>
    %9 = math.rsqrt %8 : vector<16x1xf32>
    %10 = vector.broadcast %9 : vector<16x1xf32> to vector<16x128xf32>
    %11 = vector.broadcast %1 : vector<1x128xf32> to vector<16x128xf32>
    %12 = arith.mulf %10, %11 : vector<16x128xf32>
    %13 = arith.mulf %0, %12 : vector<16x128xf32>
    %c0_5 = arith.constant 0 : index
    %c0_6 = arith.constant 0 : index
    %14 = vector.load %arg3[%c0_5, %c0_6] : memref<16x128xf32, #tpu.memory_space<vmem>>, vector<16x128xf32>
    tpu.vector_store %arg3[%c0_5, %c0_6], %13 {strides = array<i32>} : memref<16x128xf32, #tpu.memory_space<vmem>>, vector<16x128xf32>,
    return
  }
  func.func @transform_0(%arg0: i32) -> (i32, i32) {
    %c0_i32 = arith.constant 0 : i32
    %c0_i32_0 = arith.constant 0 : i32
    return %arg0, %c0_i32 : i32, i32
  }
  func.func @transform_1(%arg0: i32) -> (i32, i32) {
    %c0_i32 = arith.constant 0 : i32
    %c0_i32_0 = arith.constant 0 : i32
    %c0_i32_1 = arith.constant 0 : i32
    return %c0_i32, %c0_i32_0 : i32, i32
  }
  func.func @transform_2(%arg0: i32) -> (i32, i32) {
    %c0_i32 = arith.constant 0 : i32
    %c0_i32_0 = arith.constant 0 : i32
    return %arg0, %c0_i32 : i32, i32
  }
}

</mosaic_0001>

<llo_original>
// kernel: tpu_custom_call.1
$region0: #{tpu_custom_call.1}
  #allocation0 [shape = 'u32[]', space=smem, size = 0x4, offset = 0x4, fixed_abs, tag = 'smem constant byte address 0x4 - core index']
  #allocation1 [shape = 'u32[72,128]{1,0:T(1,128)}', space=vmem, size = 0x9000, scoped, tag = 'internal scratch']
  %s0 = inlined_call_operand.hbm [shape: f32[16,128], index: 0, kind: input, shape index: {}]
  %s1 = inlined_call_operand.hbm [shape: f32[1,128], index: 1, kind: input, shape index: {}]
  %s2 = inlined_call_operand.hbm [shape: f32[16,128], index: 2, kind: output, shape index: {}]
  %s3 = sld [smem:[#allocation0]]
  $region26: #{tpu_custom_call.1} parent=0
    _
  %s5 = ssub.s32 1, %s3
  %s6 = scalar_select 0, %s5, %s3
  $region1: #{tpu_custom_call.1} parent=0
    #allocation2 [shape = 'u8[8192]{0}', space=vmem, size = 0x2000, scoped, tag = 'input window, operand 0, single buffered']
    #allocation3 [shape = 's32[1]{0}', space=sflag, size = 0x4, scoped, tag = 'scoped memory for tpu_custom_call.1']
    #allocation4 [shape = 's32[1]{0}', space=sflag, size = 0x4, scoped, tag = 'scoped memory for tpu_custom_call.1']
    #allocation5 [shape = 'u8[512]{0}', space=vmem, size = 0x400, scoped, tag = 'input window, operand 1, single buffered']
    #allocation6 [shape = 's32[1]{0}', space=sflag, size = 0x4, scoped, tag = 'scoped memory for tpu_custom_call.1']
    #allocation7 [shape = 'u8[8192]{0}', space=vmem, size = 0x2000, scoped, tag = 'output window, operand 0, single buffered']
    %7 = vsyncpa [#allocation3], 0
    %8 = vsyncpa [#allocation6], 0
    %9 = vsyncpa [#allocation4], 0
    // Predicated region
    $region2: #{tpu_custom_call.1} parent=1 // pred_check
      _
    $region3: #{tpu_custom_call.1} parent=1 // pred_check_branch
      %11 = sbr.rel (0) target = $region5
    $region4: #{tpu_custom_call.1} parent=1 // pred_region
      %13 = vsyncadd [#allocation3], 0
      %s14 = sshll.u32 %s0, 4
      %s15 = int_to_ptr.hbm [resolvable:$true] %s14
      %s16 = sshll.u32 [#allocation2], 4
      %s17 = int_to_ptr.vmem [resolvable:$true] %s16
      %22 = dma.hbm_to_vmem [thread:$0]  %s15, 256, %s17, [#allocation3], 128, 128, 8
    $region5: #{tpu_custom_call.1} parent=1 // pred_fallthru
      _
    // Predicated region
    $region6: #{tpu_custom_call.1} parent=1 // pred_check
      _
    $region7: #{tpu_custom_call.1} parent=1 // pred_check_branch
      %24 = sbr.rel (0) target = $region9
    $region8: #{tpu_custom_call.1} parent=1 // pred_region
      %26 = vsyncadd [#allocation6], 0
      %s28 = sshll.u32 %s1, 4
      %s29 = int_to_ptr.hbm [resolvable:$true] %s28
      %s30 = sshll.u32 [#allocation5], 4
      %s31 = int_to_ptr.vmem [resolvable:$true] %s30
      %33 = dma.hbm_to_vmem [thread:$0]  %s29, 16, %s31, [#allocation6]
    $region9: #{tpu_custom_call.1} parent=1 // pred_fallthru
      _
    // Predicated region
    $region10: #{tpu_custom_call.1} parent=1 // pred_check
      _
    $region11: #{tpu_custom_call.1} parent=1 // pred_check_branch
      %35 = sbr.rel (0) target = $region13
    $region12: #{tpu_custom_call.1} parent=1 // pred_region
      %37 = dma.done [#allocation3], 256
    $region13: #{tpu_custom_call.1} parent=1 // pred_fallthru
      _
    // Predicated region
    $region14: #{tpu_custom_call.1} parent=1 // pred_check
      _
    $region15: #{tpu_custom_call.1} parent=1 // pred_check_branch
      %39 = sbr.rel (0) target = $region17
    $region16: #{tpu_custom_call.1} parent=1 // pred_region
      %41 = dma.done [#allocation6], 16
    $region17: #{tpu_custom_call.1} parent=1 // pred_fallthru
      _
    %v42 = vld [vmem:[#allocation2] sm:$0xff]
    %v43 = vld [vmem:[#allocation2 + $0x8] sm:$0xff]
    %v44 = vld [vmem:[#allocation5] sm:$0x1]
    %v45 = vmul.f32 %v42, %v42
    %v46 = vmul.f32 %v43, %v43
    %47 = vadd.xlane.f32.xlu0 %v45
    %v48 = vpop.xlane.xlu0 %47
    %49 = vadd.xlane.f32.xlu0 %v46
    %v50 = vpop.xlane.xlu0 %49
    %v51 = vmul.f32 %v48, 0.0078125
    %v52 = vmul.f32 %v50, 0.0078125
    %v53 = vadd.f32 %v51, 1e-05
    %v54 = vadd.f32 %v52, 1e-05
    %v55 = vrsqrt.pop %v53
    %v56 = vmul.f32 %v55, %v53
    %v57 = vmul.f32 %v56, %v55
    %v58 = vmul.f32 0.5, %v57
    %v59 = vsub.f32 1.5, %v58
    %v60 = vmul.f32 %v55, %v59
    %vm61 = vweird.f32 %v53
    %vm62 = vweird.f32 %v55
    %vm63 = vmor %vm61, %vm62
    %v64 = vsel %vm63, %v55, %v60
    %v65 = vrsqrt.pop %v54
    %v66 = vmul.f32 %v65, %v54
    %v67 = vmul.f32 %v66, %v65
    %v68 = vmul.f32 0.5, %v67
    %v69 = vsub.f32 1.5, %v68
    %v70 = vmul.f32 %v65, %v69
    %vm71 = vweird.f32 %v54
    %vm72 = vweird.f32 %v65
    %vm73 = vmor %vm71, %vm72
    %v74 = vsel %vm73, %v65, %v70
    %v76 = vperm.slane %v44, 0
    %v78 = vmul.f32 %v64, %v76
    %v79 = vmul.f32 %v74, %v76
    %v80 = vmul.f32 %v42, %v78
    %v81 = vmul.f32 %v43, %v79
    %82 = vst [vmem:[#allocation7] sm:$0xff] %v80
    %83 = vst [vmem:[#allocation7 + $0x8] sm:$0xff] %v81
    // Predicated region
    $region18: #{tpu_custom_call.1} parent=1 // pred_check
      _
    $region19: #{tpu_custom_call.1} parent=1 // pred_check_branch
      %85 = sbr.rel (0) target = $region21
    $region20: #{tpu_custom_call.1} parent=1 // pred_region
      %87 = vsyncadd [#allocation4], 0
      %s88 = sshll.u32 [#allocation7], 4
      %s89 = int_to_ptr.vmem [resolvable:$true] %s88
      %s90 = sshll.u32 %s2, 4
      %s91 = int_to_ptr.hbm [resolvable:$true] %s90
      %96 = dma.vmem_to_hbm [thread:$0]  %s89, 256, %s91, [#allocation4], 128, 128, 8
    $region21: #{tpu_custom_call.1} parent=1 // pred_fallthru
      _
    // Predicated region
    $region22: #{tpu_custom_call.1} parent=1 // pred_check
      _
    $region23: #{tpu_custom_call.1} parent=1 // pred_check_branch
      %98 = sbr.rel (0) target = $region25
    $region24: #{tpu_custom_call.1} parent=1 // pred_region
      %100 = dma.done [#allocation4], 256
    $region25: #{tpu_custom_call.1} parent=1 // pred_fallthru
      _
    %101 = vsyncpa [#allocation3], 1
    %102 = vsyncpa [#allocation6], 1
    %103 = vsyncpa [#allocation4], 1

</llo_original>
